<compile_context>
chip_gen: v7x
topology: tpu7x:2x2x1
jax: 0.10.0
libtpu: 0.0.40
codegen_flags: <defaults>
</compile_context>

<pallas_src>
import functools

import jax
import jax.numpy as jnp
from jax.experimental import pallas as pl
from jax.experimental.pallas import tpu as pltpu

# ----------------------------- config ---------------------------------------
N_AGENTS = 4
LATENT_DIM = 8
STATE_DIM = 32                       # prod(state_shape)
EMBED_DIM = 32                       # mixing_embed_dim
NN_HIDDEN_SIZE = STATE_DIM           # latent_net output size
HIDDEN_ALL = STATE_DIM + NN_HIDDEN_SIZE   # concat_ori_s=True
BN_EPS = 1e-5
LEAKY_SLOPE = 0.01                   # nn.LeakyReLU default

# Packed activation layout (single lane-dense operand): [states | skill | agent_qs]
ST_OFF = 0
SK_OFF = STATE_DIM                   # 32
QS_OFF = STATE_DIM + LATENT_DIM      # 40
PACK_W = STATE_DIM + LATENT_DIM + N_AGENTS   # 44

# Fused hypernet head column layout (padded to 256 for clean MXU tiling):
#   [ w1 (A*E = 128) | w_final (32) | b1 (32) | v_h (32) | zero pad (32) ]
W1_COLS = N_AGENTS * EMBED_DIM       # 128
ABS_COLS = W1_COLS + EMBED_DIM       # 160  (abs() applies to the w1|w_final range)
HEAD_COLS = W1_COLS + 3 * EMBED_DIM  # 224
HEAD_PAD = 256


def _round_up(n, m):
    return ((n + m - 1) // m) * m


# ----------------------------- kernel ---------------------------------------
def hqmix_kernel(
    x_ref,        # (TB, PACK_W)  packed [states | skill | agent_qs]
    wl_ref,       # (PACK_W, 32)  latent linear (BN folded), nonzero only on skill rows
    bl_ref,       # (1, 32)       latent bias (BN folded)
    wtop_ref,     # (PACK_W, 256) fused hypernet weight, nonzero only on states rows
    wbot_ref,     # (32, 256)     fused hypernet weight applied to r_s
    bh_ref,       # (1, 256)      fused hypernet bias
    wv2_ref,      # (1, 32)       V second-layer weight (as a row)
    bv2_ref,      # (1, 1)        V second-layer bias
    out_ref,      # (TB, 1)
    *, n_agents, embed_dim,
):
    f32 = jnp.float32
    x = x_ref[...]                                                   # (TB, 44)

    # ---- latent_net: Linear + BatchNorm (pre-folded) + LeakyReLU --------------
    r_pre = jnp.dot(x, wl_ref[...], preferred_element_type=f32) + bl_ref[...]
    r_s = jnp.where(r_pre >= 0, r_pre, LEAKY_SLOPE * r_pre)          # (TB, 32)

    # ---- fused hypernet heads: heads = [states|r_s] @ W_fused + b_fused -------
    # (concat removed: states rows live in wtop, r_s rows in wbot)
    heads = (jnp.dot(x, wtop_ref[...], preferred_element_type=f32)
             + jnp.dot(r_s, wbot_ref[...], preferred_element_type=f32)
             + bh_ref[...])                                          # (TB, 256)

    # abs() on the [w1 | w_final] column range, as one lane-dense select.
    col = jax.lax.broadcasted_iota(jnp.int32, heads.shape, 1)
    heads = jnp.where(col < ABS_COLS, jnp.abs(heads), heads)

    w1 = heads[:, 0:W1_COLS]                                          # (TB, 128)
    w_final = heads[:, W1_COLS:W1_COLS + embed_dim]                   # (TB, 32)
    b1 = heads[:, W1_COLS + embed_dim:W1_COLS + 2 * embed_dim]        # (TB, 32)
    v_h = heads[:, W1_COLS + 2 * embed_dim:W1_COLS + 3 * embed_dim]   # (TB, 32)

    # bmm(agent_qs (B,1,A), w1 (B,A,E)) -> static tiny agent loop.
    hidden_pre = b1
    for a in range(n_agents):
        q_a = x[:, QS_OFF + a:QS_OFF + a + 1]                         # (TB, 1)
        hidden_pre = hidden_pre + q_a * w1[:, a * embed_dim:(a + 1) * embed_dim]
    # ELU(alpha=1).  exp(x)-1 used (instead of expm1) for guaranteed Mosaic lowering;
    # difference vs torch's expm1-based ELU is well below the 1e-4 tolerance here.
    hidden = jnp.where(hidden_pre > 0, hidden_pre, jnp.exp(hidden_pre) - 1.0)

    # V head second layer (N=1 matmul) fused into the final lane reduction:
    #   y = sum(hidden*w_final + relu(v_h)*wv2_row, -1) + bv2
    v_h = jnp.maximum(v_h, 0.0)
    y = (jnp.sum(hidden * w_final + v_h * wv2_ref[...], axis=-1, keepdims=True)
         + bv2_ref[...])                                              # (TB, 1)
    out_ref[...] = y.astype(out_ref.dtype)


# ----------------------------- wrapper ---------------------------------------
def hqmixer_forward(agent_qs, states, skill, params, *, block_rows=1024):
    """block_rows: batch tile; ~1-4K is a good range on v6e/v7x, larger ok on v5e."""
    bs, t, n_agents = agent_qs.shape
    assert n_agents == N_AGENTS
    b = bs * t
    qs = agent_qs.reshape(b, n_agents).astype(jnp.float32)
    st = states.reshape(b, STATE_DIM).astype(jnp.float32)
    sk = skill.reshape(b, LATENT_DIM).astype(jnp.float32)

    # ---- BatchNorm (training-mode) batch statistics, hoisted so the kernel tiles over batch.
    # TODO(synk): this tiny (B,8)@(8,32) stats pass stays in plain JAX; it is a batch-global
    # reduction and could be a small first-pass Pallas kernel if desired.
    h = sk @ params["wl"] + params["bl"]                              # (B, 32)
    mean = jnp.mean(h, axis=0, keepdims=True)
    var = jnp.mean((h - mean) ** 2, axis=0, keepdims=True)            # biased (training mode)
    scale = params["bn_g"] / jnp.sqrt(var + BN_EPS)                   # (1, 32)
    shift = params["bn_b"] - mean * scale
    wl_eff = params["wl"] * scale                                     # (8, 32), BN folded
    bl_eff = params["bl"] * scale + shift                             # (1, 32)
    # Lay the latent weight out against the packed activation (only skill rows nonzero).
    wl_packed = jnp.zeros((PACK_W, NN_HIDDEN_SIZE), jnp.float32)
    wl_packed = wl_packed.at[SK_OFF:SK_OFF + LATENT_DIM].set(wl_eff)

    # ---- fuse the four hypernet heads (same input) into one padded weight slab.
    w_fused = jnp.concatenate(
        [params["ww1"], params["wwf"], params["wb1"], params["wv1"]], axis=1)  # (64, 224)
    b_fused = jnp.concatenate(
        [params["bw1"], params["bwf"], params["bb1"], params["bv1"]], axis=1)  # (1, 224)
    w_fused = jnp.pad(w_fused, ((0, 0), (0, HEAD_PAD - HEAD_COLS)))            # (64, 256)
    b_fused = jnp.pad(b_fused, ((0, 0), (0, HEAD_PAD - HEAD_COLS)))            # (1, 256)
    # Split concat([states, r_s]) into two K=32 matmuls (no in-kernel concat):
    #   heads = packed_x @ w_top + r_s @ w_bot + b_fused
    w_top = jnp.zeros((PACK_W, HEAD_PAD), jnp.float32)
    w_top = w_top.at[ST_OFF:ST_OFF + STATE_DIM].set(w_fused[:STATE_DIM])       # (44, 256)
    w_bot = w_fused[STATE_DIM:]                                                # (32, 256)

    wv2_row = params["wv2"].reshape(1, EMBED_DIM)                              # (1, 32)
    bv2 = params["bv2"].reshape(1, 1)

    # ---- pack activations into one lane-dense operand; pad batch to the tile size.
    x = jnp.concatenate([st, sk, qs], axis=1)                                  # (B, 44)
    tb = min(block_rows, _round_up(b, 8))
    b_pad = _round_up(b, tb)
    if b_pad != b:
        x = jnp.pad(x, ((0, b_pad - b), (0, 0)))
    grid = (b_pad // tb,)

    kernel = functools.partial(hqmix_kernel, n_agents=n_agents, embed_dim=EMBED_DIM)
    weight_ops = [wl_packed, bl_eff, w_top, w_bot, b_fused, wv2_row, bv2]

    out = pl.pallas_call(
        kernel,
        out_shape=jax.ShapeDtypeStruct((b_pad, 1), jnp.float32),
        grid=grid,
        in_specs=[pl.BlockSpec((tb, PACK_W), lambda i: (i, 0))]
                 + [pl.BlockSpec(w.shape, lambda i: (0, 0)) for w in weight_ops],
        out_specs=pl.BlockSpec((tb, 1), lambda i: (i, 0)),
        compiler_params=pltpu.CompilerParams(
            dimension_semantics=("parallel",),          # megacore sharding on v7x
            vmem_limit_bytes=48 * 1024 * 1024),
    )(x, *weight_ops)

    return out[:b].reshape(bs, t, 1)                                            # q_tot


# ----------------------------- reference (pure JAX, mirrors PyTorch) ----------
def hqmixer_reference(agent_qs, states, skill, params):
    bs, t, n_agents = agent_qs.shape
    b = bs * t
    qs = agent_qs.reshape(b, 1, n_agents)
    st = states.reshape(b, STATE_DIM)
    sk = skill.reshape(b, LATENT_DIM)

    h = sk @ params["wl"] + params["bl"]
    mean = jnp.mean(h, axis=0, keepdims=True)
    var = jnp.mean((h - mean) ** 2, axis=0, keepdims=True)
    hn = (h - mean) / jnp.sqrt(var + BN_EPS) * params["bn_g"] + params["bn_b"]
    r_s = jnp.where(hn >= 0, hn, LEAKY_SLOPE * hn)

    inp = jnp.concatenate([st, r_s], axis=-1)
    w1 = jnp.abs(inp @ params["ww1"] + params["bw1"]).reshape(b, n_agents, EMBED_DIM)
    b1 = (inp @ params["wb1"] + params["bb1"]).reshape(b, 1, EMBED_DIM)
    hp = jnp.einsum("bia,bae->bie", qs, w1) + b1
    hidden = jnp.where(hp > 0, hp, jnp.exp(hp) - 1.0)
    w_f = jnp.abs(inp @ params["wwf"] + params["bwf"]).reshape(b, EMBED_DIM, 1)
    v = (jnp.maximum(inp @ params["wv1"] + params["bv1"], 0.0) @ params["wv2"]
         + params["bv2"]).reshape(b, 1, 1)
    y = jnp.einsum("bie,bej->bij", hidden, w_f) + v
    return y.reshape(bs, t, 1)


# ----------------------------- param init ------------------------------------
def init_params(key):
    def linear(k, fan_in, fan_out):
        kw, kb = jax.random.split(k)
        bound = 1.0 / jnp.sqrt(jnp.float32(fan_in))
        w = jax.random.uniform(kw, (fan_in, fan_out), jnp.float32, -bound, bound)
        bbias = jax.random.uniform(kb, (1, fan_out), jnp.float32, -bound, bound)
        return w, bbias

    ks = jax.random.split(key, 8)
    wl, bl = linear(ks[0], LATENT_DIM, NN_HIDDEN_SIZE)
    ww1, bw1 = linear(ks[1], HIDDEN_ALL, EMBED_DIM * N_AGENTS)
    wb1, bb1 = linear(ks[2], HIDDEN_ALL, EMBED_DIM)
    wwf, bwf = linear(ks[3], HIDDEN_ALL, EMBED_DIM)
    wv1, bv1 = linear(ks[4], HIDDEN_ALL, EMBED_DIM)
    wv2, bv2 = linear(ks[5], EMBED_DIM, 1)
    return dict(
        wl=wl, bl=bl,
        bn_g=jnp.ones((1, NN_HIDDEN_SIZE), jnp.float32),
        bn_b=jnp.zeros((1, NN_HIDDEN_SIZE), jnp.float32),
        ww1=ww1, bw1=bw1, wb1=wb1, bb1=bb1,
        wwf=wwf, bwf=bwf, wv1=wv1, bv1=bv1, wv2=wv2, bv2=bv2,
    )


# ----------------------------- main -------------------------------------------
if __name__ == "__main__":
    key = jax.random.PRNGKey(0)
    kp, kq, ks, kk = jax.random.split(key, 4)

    bs, T = 2, 8
    agent_qs = jax.random.normal(kq, (bs, T, N_AGENTS), jnp.float32)
    states = jax.random.normal(ks, (bs, T, STATE_DIM), jnp.float32)
    skill = jax.random.normal(kk, (bs, T, LATENT_DIM), jnp.float32)

    params = init_params(kp)

    q_tot = hqmixer_forward(agent_qs, states, skill, params)
    q_tot = jax.block_until_ready(q_tot)
    assert q_tot.shape == (bs, T, 1)

    q_ref = hqmixer_reference(agent_qs, states, skill, params)
    assert jnp.allclose(q_tot, q_ref, atol=1e-4, rtol=1e-4), (q_tot, q_ref)

    print("KERNEL_OK")
</pallas_src>

<mosaic_0001>
module attributes {stable_mosaic.version = 11 : i64} {
  func.func @hqmix_kernel(%arg0: i32, %arg1: memref<16x44xf32, #tpu.memory_space<vmem>>, %arg2: memref<44x32xf32, #tpu.memory_space<vmem>>, %arg3: memref<1x32xf32, #tpu.memory_space<vmem>>, %arg4: memref<44x256xf32, #tpu.memory_space<vmem>>, %arg5: memref<32x256xf32, #tpu.memory_space<vmem>>, %arg6: memref<1x256xf32, #tpu.memory_space<vmem>>, %arg7: memref<1x32xf32, #tpu.memory_space<vmem>>, %arg8: memref<1x1xf32, #tpu.memory_space<vmem>>, %arg9: memref<16x1xf32, #tpu.memory_space<vmem>>) attributes {dimension_semantics = [#tpu.dimension_semantics<parallel>], iteration_bounds = array<i64: 1>, scalar_prefetch = 0 : i64, scratch_operands = 0 : i64, tpu.core_type = #tpu.core_type<tc>, window_params = [{transform_indices = @transform_0, window_bounds = array<i64: 16, 44>}, {pipeline_mode = #tpu.pipeline_mode<synchronous>, transform_indices = @transform_1, window_bounds = array<i64: 44, 32>}, {pipeline_mode = #tpu.pipeline_mode<synchronous>, transform_indices = @transform_2, window_bounds = array<i64: 1, 32>}, {pipeline_mode = #tpu.pipeline_mode<synchronous>, transform_indices = @transform_3, window_bounds = array<i64: 44, 256>}, {pipeline_mode = #tpu.pipeline_mode<synchronous>, transform_indices = @transform_4, window_bounds = array<i64: 32, 256>}, {pipeline_mode = #tpu.pipeline_mode<synchronous>, transform_indices = @transform_5, window_bounds = array<i64: 1, 256>}, {pipeline_mode = #tpu.pipeline_mode<synchronous>, transform_indices = @transform_6, window_bounds = array<i64: 1, 32>}, {pipeline_mode = #tpu.pipeline_mode<synchronous>, transform_indices = @transform_7, window_bounds = array<i64: 1, 1>}, {transform_indices = @transform_8, window_bounds = array<i64: 16, 1>}]} {
    %c0 = arith.constant 0 : index
    %c0_0 = arith.constant 0 : index
    %0 = vector.load %arg1[%c0, %c0_0] : memref<16x44xf32, #tpu.memory_space<vmem>>, vector<16x44xf32>
    %c0_1 = arith.constant 0 : index
    %c0_2 = arith.constant 0 : index
    %1 = vector.load %arg2[%c0_1, %c0_2] : memref<44x32xf32, #tpu.memory_space<vmem>>, vector<44x32xf32>
    %cst = arith.constant dense<0.000000e+00> : vector<16x32xf32>
    %2 = tpu.matmul %0, %1, %cst {dimension_numbers = #tpu.dot_dimension_numbers<[1], [0], [0], [1], [0, 0, 1, 1], [], []>} : vector<16x44xf32>, vector<44x32xf32>, vector<16x32xf32> -> vector<16x32xf32>
    %c0_3 = arith.constant 0 : index
    %c0_4 = arith.constant 0 : index
    %3 = vector.load %arg3[%c0_3, %c0_4] : memref<1x32xf32, #tpu.memory_space<vmem>>, vector<1x32xf32>
    %4 = vector.broadcast %3 : vector<1x32xf32> to vector<16x32xf32>
    %5 = arith.addf %2, %4 : vector<16x32xf32>
    %cst_5 = arith.constant 0.000000e+00 : f32
    %6 = vector.broadcast %cst_5 : f32 to vector<16x32xf32>
    %7 = arith.cmpf oge, %5, %6 : vector<16x32xf32>
    %cst_6 = arith.constant 0.00999999977 : f32
    %8 = vector.broadcast %cst_6 : f32 to vector<16x32xf32>
    %9 = arith.mulf %8, %5 : vector<16x32xf32>
    %10 = arith.select %7, %5, %9 : vector<16x32xi1>, vector<16x32xf32>
    %c0_7 = arith.constant 0 : index
    %c0_8 = arith.constant 0 : index
    %11 = vector.load %arg4[%c0_7, %c0_8] : memref<44x256xf32, #tpu.memory_space<vmem>>, vector<44x256xf32>
    %cst_9 = arith.constant dense<0.000000e+00> : vector<16x256xf32>
    %12 = tpu.matmul %0, %11, %cst_9 {dimension_numbers = #tpu.dot_dimension_numbers<[1], [0], [0], [1], [0, 0, 1, 1], [], []>} : vector<16x44xf32>, vector<44x256xf32>, vector<16x256xf32> -> vector<16x256xf32>
    %c0_10 = arith.constant 0 : index
    %c0_11 = arith.constant 0 : index
    %13 = vector.load %arg5[%c0_10, %c0_11] : memref<32x256xf32, #tpu.memory_space<vmem>>, vector<32x256xf32>
    %cst_12 = arith.constant dense<0.000000e+00> : vector<16x256xf32>
    %14 = tpu.matmul %10, %13, %cst_12 {dimension_numbers = #tpu.dot_dimension_numbers<[1], [0], [0], [1], [0, 0, 1, 1], [], []>} : vector<16x32xf32>, vector<32x256xf32>, vector<16x256xf32> -> vector<16x256xf32>
    %15 = arith.addf %12, %14 : vector<16x256xf32>
    %c0_13 = arith.constant 0 : index
    %c0_14 = arith.constant 0 : index
    %16 = vector.load %arg6[%c0_13, %c0_14] : memref<1x256xf32, #tpu.memory_space<vmem>>, vector<1x256xf32>
    %17 = vector.broadcast %16 : vector<1x256xf32> to vector<16x256xf32>
    %18 = arith.addf %15, %17 : vector<16x256xf32>
    %19 = tpu.iota {dimensions = array<i32: 1>} : vector<16x256xi32>
    %c160_i32 = arith.constant 160 : i32
    %20 = vector.broadcast %c160_i32 : i32 to vector<16x256xi32>
    %21 = arith.cmpi slt, %19, %20 : vector<16x256xi32>
    %22 = math.absf %18 : vector<16x256xf32>
    %23 = arith.select %21, %22, %18 : vector<16x256xi1>, vector<16x256xf32>
    %24 = vector.extract_strided_slice %23 {offsets = [0, 0], sizes = [16, 128], strides = [1, 1]} : vector<16x256xf32> to vector<16x128xf32>
    %25 = vector.extract_strided_slice %23 {offsets = [0, 128], sizes = [16, 32], strides = [1, 1]} : vector<16x256xf32> to vector<16x32xf32>
    %26 = vector.extract_strided_slice %23 {offsets = [0, 160], sizes = [16, 32], strides = [1, 1]} : vector<16x256xf32> to vector<16x32xf32>
    %27 = vector.extract_strided_slice %23 {offsets = [0, 192], sizes = [16, 32], strides = [1, 1]} : vector<16x256xf32> to vector<16x32xf32>
    %28 = vector.extract_strided_slice %0 {offsets = [0, 40], sizes = [16, 1], strides = [1, 1]} : vector<16x44xf32> to vector<16x1xf32>
    %29 = vector.extract_strided_slice %24 {offsets = [0, 0], sizes = [16, 32], strides = [1, 1]} : vector<16x128xf32> to vector<16x32xf32>
    %30 = vector.broadcast %28 : vector<16x1xf32> to vector<16x32xf32>
    %31 = arith.mulf %30, %29 : vector<16x32xf32>
    %32 = arith.addf %26, %31 : vector<16x32xf32>
    %33 = vector.extract_strided_slice %0 {offsets = [0, 41], sizes = [16, 1], strides = [1, 1]} : vector<16x44xf32> to vector<16x1xf32>
    %34 = vector.extract_strided_slice %24 {offsets = [0, 32], sizes = [16, 32], strides = [1, 1]} : vector<16x128xf32> to vector<16x32xf32>
    %35 = vector.broadcast %33 : vector<16x1xf32> to vector<16x32xf32>
    %36 = arith.mulf %35, %34 : vector<16x32xf32>
    %37 = arith.addf %32, %36 : vector<16x32xf32>
    %38 = vector.extract_strided_slice %0 {offsets = [0, 42], sizes = [16, 1], strides = [1, 1]} : vector<16x44xf32> to vector<16x1xf32>
    %39 = vector.extract_strided_slice %24 {offsets = [0, 64], sizes = [16, 32], strides = [1, 1]} : vector<16x128xf32> to vector<16x32xf32>
    %40 = vector.broadcast %38 : vector<16x1xf32> to vector<16x32xf32>
    %41 = arith.mulf %40, %39 : vector<16x32xf32>
    %42 = arith.addf %37, %41 : vector<16x32xf32>
    %43 = vector.extract_strided_slice %0 {offsets = [0, 43], sizes = [16, 1], strides = [1, 1]} : vector<16x44xf32> to vector<16x1xf32>
    %44 = vector.extract_strided_slice %24 {offsets = [0, 96], sizes = [16, 32], strides = [1, 1]} : vector<16x128xf32> to vector<16x32xf32>
    %45 = vector.broadcast %43 : vector<16x1xf32> to vector<16x32xf32>
    %46 = arith.mulf %45, %44 : vector<16x32xf32>
    %47 = arith.addf %42, %46 : vector<16x32xf32>
    %cst_15 = arith.constant 0.000000e+00 : f32
    %48 = vector.broadcast %cst_15 : f32 to vector<16x32xf32>
    %49 = arith.cmpf ogt, %47, %48 : vector<16x32xf32>
    %50 = math.exp %47 : vector<16x32xf32>
    %cst_16 = arith.constant 1.000000e+00 : f32
    %51 = vector.broadcast %cst_16 : f32 to vector<16x32xf32>
    %52 = arith.subf %50, %51 : vector<16x32xf32>
    %53 = arith.select %49, %47, %52 : vector<16x32xi1>, vector<16x32xf32>
    %cst_17 = arith.constant 0.000000e+00 : f32
    %54 = vector.broadcast %cst_17 : f32 to vector<16x32xf32>
    %55 = arith.maximumf %27, %54 : vector<16x32xf32>
    %56 = arith.mulf %53, %25 : vector<16x32xf32>
    %c0_18 = arith.constant 0 : index
    %c0_19 = arith.constant 0 : index
    %57 = vector.load %arg7[%c0_18, %c0_19] : memref<1x32xf32, #tpu.memory_space<vmem>>, vector<1x32xf32>
    %58 = vector.broadcast %57 : vector<1x32xf32> to vector<16x32xf32>
    %59 = arith.mulf %55, %58 : vector<16x32xf32>
    %60 = arith.addf %56, %59 : vector<16x32xf32>
    %cst_20 = arith.constant dense<0.000000e+00> : vector<16xf32>
    %61 = vector.multi_reduction <add>, %60, %cst_20 [1] : vector<16x32xf32> to vector<16xf32>
    %62 = vector.shape_cast %61 : vector<16xf32> to vector<16x1xf32>
    %c0_21 = arith.constant 0 : index
    %c0_22 = arith.constant 0 : index
    %63 = vector.load %arg8[%c0_21, %c0_22] : memref<1x1xf32, #tpu.memory_space<vmem>>, vector<1x1xf32>
    %64 = vector.broadcast %63 : vector<1x1xf32> to vector<16x1xf32>
    %65 = arith.addf %62, %64 : vector<16x1xf32>
    %c0_23 = arith.constant 0 : index
    %c0_24 = arith.constant 0 : index
    %66 = vector.load %arg9[%c0_23, %c0_24] : memref<16x1xf32, #tpu.memory_space<vmem>>, vector<16x1xf32>
    tpu.vector_store %arg9[%c0_23, %c0_24], %65 {strides = array<i32>} : memref<16x1xf32, #tpu.memory_space<vmem>>, vector<16x1xf32>,
    return
  }
  func.func @transform_0(%arg0: i32) -> (i32, i32) {
    %c0_i32 = arith.constant 0 : i32
    %c0_i32_0 = arith.constant 0 : i32
    return %arg0, %c0_i32 : i32, i32
  }
  func.func @transform_1(%arg0: i32) -> (i32, i32) {
    %c0_i32 = arith.constant 0 : i32
    %c0_i32_0 = arith.constant 0 : i32
    %c0_i32_1 = arith.constant 0 : i32
    return %c0_i32, %c0_i32_0 : i32, i32
  }
  func.func @transform_2(%arg0: i32) -> (i32, i32) {
    %c0_i32 = arith.constant 0 : i32
    %c0_i32_0 = arith.constant 0 : i32
    %c0_i32_1 = arith.constant 0 : i32
    return %c0_i32, %c0_i32_0 : i32, i32
  }
  func.func @transform_3(%arg0: i32) -> (i32, i32) {
    %c0_i32 = arith.constant 0 : i32
    %c0_i32_0 = arith.constant 0 : i32
    %c0_i32_1 = arith.constant 0 : i32
    return %c0_i32, %c0_i32_0 : i32, i32
  }
  func.func @transform_4(%arg0: i32) -> (i32, i32) {
    %c0_i32 = arith.constant 0 : i32
    %c0_i32_0 = arith.constant 0 : i32
    %c0_i32_1 = arith.constant 0 : i32
    return %c0_i32, %c0_i32_0 : i32, i32
  }
  func.func @transform_5(%arg0: i32) -> (i32, i32) {
    %c0_i32 = arith.constant 0 : i32
    %c0_i32_0 = arith.constant 0 : i32
    %c0_i32_1 = arith.constant 0 : i32
    return %c0_i32, %c0_i32_0 : i32, i32
  }
  func.func @transform_6(%arg0: i32) -> (i32, i32) {
    %c0_i32 = arith.constant 0 : i32
    %c0_i32_0 = arith.constant 0 : i32
    %c0_i32_1 = arith.constant 0 : i32
    return %c0_i32, %c0_i32_0 : i32, i32
  }
  func.func @transform_7(%arg0: i32) -> (i32, i32) {
    %c0_i32 = arith.constant 0 : i32
    %c0_i32_0 = arith.constant 0 : i32
    %c0_i32_1 = arith.constant 0 : i32
    return %c0_i32, %c0_i32_0 : i32, i32
  }
  func.func @transform_8(%arg0: i32) -> (i32, i32) {
    %c0_i32 = arith.constant 0 : i32
    %c0_i32_0 = arith.constant 0 : i32
    return %arg0, %c0_i32 : i32, i32
  }
}

</mosaic_0001>

<llo_original>
// kernel: tpu_custom_call.1
$region0: #{tpu_custom_call.1}
  #allocation0 [shape = 'u32[]', space=smem, size = 0x4, offset = 0x4, fixed_abs, tag = 'smem constant byte address 0x4 - core index']
  #allocation1 [shape = 'u32[144,128]{1,0:T(1,128)}', space=vmem, size = 0x12000, scoped, tag = 'internal scratch']
  #allocation2 [shape = 'f32[1,1]{1,0:T(1,128)S(1)}', space=vmem, size = 0x200, scoped, tag = 'scoped memory for tpu_custom_call.1']
  %s0 = inlined_call_operand.vmem [shape: f32[16,44], index: 0, kind: input, shape index: {}]
  %s1 = inlined_call_operand.vmem [shape: f32[44,32], index: 1, kind: input, shape index: {}]
  %s2 = inlined_call_operand.vmem [shape: f32[1,32], index: 2, kind: input, shape index: {}]
  %s3 = inlined_call_operand.hbm [shape: f32[44,256], index: 3, kind: input, shape index: {}]
  %s4 = inlined_call_operand.vmem [shape: f32[32,256], index: 4, kind: input, shape index: {}]
  %s5 = inlined_call_operand.vmem [shape: f32[1,256], index: 5, kind: input, shape index: {}]
  %s6 = inlined_call_operand.vmem [shape: f32[1,32], index: 6, kind: input, shape index: {}]
  %s7 = inlined_call_operand.<no memory space> [shape: f32[1,1], index: 7, kind: input, shape index: {}]
  %s8 = inlined_call_operand.vmem [shape: f32[16,1], index: 8, kind: output, shape index: {}]
  %s9 = sld [smem:[#allocation0]]
  $region46: #{tpu_custom_call.1} parent=0
    _
  %s11 = ssub.s32 1, %s9
  %s12 = scalar_select 0, %s11, %s9
  %v13 = vstv %s7
  %14 = vst [vmem:[#allocation2] sm:$0x1] %v13
  $region1: #{tpu_custom_call.1} parent=0
    #allocation3 [shape = 'u8[49152]{0}', space=vmem, size = 0xc000, scoped, tag = 'input window, operand 3, single buffered']
    #allocation4 [shape = 's32[1]{0}', space=sflag, size = 0x4, scoped, tag = 'scoped memory for tpu_custom_call.1']
    %15 = vsyncpa [#allocation4], 0
    // Predicated region
    $region2: #{tpu_custom_call.1} parent=1 // pred_check
      _
    $region3: #{tpu_custom_call.1} parent=1 // pred_check_branch
      %17 = sbr.rel (0) target = $region5
    $region4: #{tpu_custom_call.1} parent=1 // pred_region
      _
    $region5: #{tpu_custom_call.1} parent=1 // pred_fallthru
      _
    // Predicated region
    $region6: #{tpu_custom_call.1} parent=1 // pred_check
      _
    $region7: #{tpu_custom_call.1} parent=1 // pred_check_branch
      %19 = sbr.rel (0) target = $region9
    $region8: #{tpu_custom_call.1} parent=1 // pred_region
      _
    $region9: #{tpu_custom_call.1} parent=1 // pred_fallthru
      _
    // Predicated region
    $region10: #{tpu_custom_call.1} parent=1 // pred_check
      _
    $region11: #{tpu_custom_call.1} parent=1 // pred_check_branch
      %21 = sbr.rel (0) target = $region13
    $region12: #{tpu_custom_call.1} parent=1 // pred_region
      _
    $region13: #{tpu_custom_call.1} parent=1 // pred_fallthru
      _
    // Predicated region
    $region14: #{tpu_custom_call.1} parent=1 // pred_check
      _
    $region15: #{tpu_custom_call.1} parent=1 // pred_check_branch
      %23 = sbr.rel (0) target = $region17
    $region16: #{tpu_custom_call.1} parent=1 // pred_region
      %s25 = ssub.s32 1536, 1536
      %26 = vsyncadd [#allocation4], %s25
      %s27 = sshll.u32 [#allocation3], 4
      %s28 = int_to_ptr.vmem [resolvable:$true] %s27
      %33 = dma.hbm_to_vmem [thread:$0]  %s3, 1536, %s28, [#allocation4], 256, 256, 16
    $region17: #{tpu_custom_call.1} parent=1 // pred_fallthru
      _
    // Predicated region
    $region18: #{tpu_custom_call.1} parent=1 // pred_check
      _
    $region19: #{tpu_custom_call.1} parent=1 // pred_check_branch
      %35 = sbr.rel (0) target = $region21
    $region20: #{tpu_custom_call.1} parent=1 // pred_region
      _
    $region21: #{tpu_custom_call.1} parent=1 // pred_fallthru
      _
    // Predicated region
    $region22: #{tpu_custom_call.1} parent=1 // pred_check
      _
    $region23: #{tpu_custom_call.1} parent=1 // pred_check_branch
      %37 = sbr.rel (0) target = $region25
    $region24: #{tpu_custom_call.1} parent=1 // pred_region
      _
    $region25: #{tpu_custom_call.1} parent=1 // pred_fallthru
      _
    // Predicated region
    $region26: #{tpu_custom_call.1} parent=1 // pred_check
      _
    $region27: #{tpu_custom_call.1} parent=1 // pred_check_branch
      %39 = sbr.rel (0) target = $region29
    $region28: #{tpu_custom_call.1} parent=1 // pred_region
      _
    $region29: #{tpu_custom_call.1} parent=1 // pred_fallthru
      _
    // Predicated region
    $region30: #{tpu_custom_call.1} parent=1 // pred_check
      _
    $region31: #{tpu_custom_call.1} parent=1 // pred_check_branch
      %41 = sbr.rel (0) target = $region33
    $region32: #{tpu_custom_call.1} parent=1 // pred_region
      _
    $region33: #{tpu_custom_call.1} parent=1 // pred_fallthru
      _
    // Predicated region
    $region34: #{tpu_custom_call.1} parent=1 // pred_check
      _
    $region35: #{tpu_custom_call.1} parent=1 // pred_check_branch
      %43 = sbr.rel (0) target = $region37
    $region36: #{tpu_custom_call.1} parent=1 // pred_region
      %44 = dma.done [#allocation4], 1536
    $region37: #{tpu_custom_call.1} parent=1 // pred_fallthru
      _
    %v45 = vld [vmem:[%s0] sm:$0xff]
    %v46 = vld [vmem:[%s0 + $0x8] sm:$0xff]
    %v47 = vld [vmem:[%s1] sm:$0xff]
    %v48 = vld [vmem:[%s1 + $0x8] sm:$0xff]
    %v49 = vld [vmem:[%s1 + $0x10] sm:$0xff]
    %v50 = vld [vmem:[%s1 + $0x18] sm:$0xff]
    %v51 = vld [vmem:[%s1 + $0x20] sm:$0xff]
    %v52 = vld [vmem:[%s1 + $0x28] sm:$0xf]
    %v53 = vld [vmem:[%s2] sm:$0x1]
    %v55 = vlaneseq
    %v56 = vshrl.u32 %v55, 7
    %v57 = vsub.s32 0, %v56
    %v58 = vrot.slane %v53, %v57
    %vm60 = vcmask 359424
    %v62 = vsel %vm60, %v45, 0
    %v65 = vsel %vm60, %v46, 0
    %vm67 = vcmask 1043456
    %v69 = vsel %vm67, %v52, 0
    %71 = vmatprep.subr.mxu0 0.0
    %72 = vmatpush1.msra.mxu0 %v47
    %73 = vmatprep.subr.mxu0 0.0
    %74 = vmatpush1.msra.mxu0 %v48
    %75 = vmatprep.subr.mxu0 0.0
    %76 = vmatpush1.msra.mxu0 %v49
    %77 = vmatprep.subr.mxu0 0.0
    %78 = vmatpush1.msra.mxu0 %v50
    %79 = vmatprep.subr.mxu0 0.0
    %80 = vmatpush1.msra.mxu0 %v51
    %81 = vmatprep.subr.mxu0 0.0
    %82 = vmatpush1.msra.mxu0 %v69
    %83 = vmatprep.subr.mxu0 0.0
    %84 = vmatpush1.msra.mxu0 0.0
    %85 = vmatprep.subr.mxu0 0.0
    %86 = vmatpush1.msra.mxu0 0.0
    %87 = vmatprep.subr.mxu0 0.0
    %88 = vmatpush1.msra.mxu0 0.0
    %89 = vmatprep.subr.mxu0 0.0
    %90 = vmatpush1.msra.mxu0 0.0
    %91 = vmatprep.subr.mxu0 0.0
    %92 = vmatpush1.msra.mxu0 0.0
    %93 = vmatprep.subr.mxu0 0.0
    %94 = vmatpush1.msra.mxu0 0.0
    %95 = vmatprep.subr.mxu0 0.0
    %96 = vmatpush1.msra.mxu0 0.0
    %97 = vmatprep.subr.mxu0 0.0
    %98 = vmatpush1.msra.mxu0 0.0
    %99 = vmatprep.subr.mxu0 0.0
    %100 = vmatpush1.msra.mxu0 0.0
    %101 = vmatprep.subr.mxu0 0.0
    %102 = vmatpush1.msra.mxu0 0.0
    %103 = vmatprep.subr.mxu0 0.0
    %104 = vmatpush1.msra.mxu0 0.0
    %105 = vmatprep.subr.mxu0 0.0
    %106 = vmatpush1.msra.mxu0 0.0
    %107 = vmatprep.subr.mxu0 0.0
    %108 = vmatpush1.msra.mxu0 0.0
    %109 = vmatprep.subr.mxu0 0.0
    %110 = vmatpush1.msra.mxu0 0.0
    %111 = vmatprep.subr.mxu0 0.0
    %112 = vmatpush1.msra.mxu0 0.0
    %113 = vmatprep.subr.mxu0 0.0
    %114 = vmatpush1.msra.mxu0 0.0
    %115 = vmatprep.subr.mxu0 0.0
    %116 = vmatpush1.msra.mxu0 0.0
    %117 = vmatprep.subr.mxu0 0.0
    %118 = vmatpush1.msra.mxu0 0.0
    %119 = vmatprep.subr.mxu0 0.0
    %120 = vmatpush1.msra.mxu0 0.0
    %121 = vmatprep.subr.mxu0 0.0
    %122 = vmatpush1.msra.mxu0 0.0
    %123 = vmatprep.subr.mxu0 0.0
    %124 = vmatpush1.msra.mxu0 0.0
    %125 = vmatprep.subr.mxu0 0.0
    %126 = vmatpush1.msra.mxu0 0.0
    %127 = vmatprep.subr.mxu0 0.0
    %128 = vmatpush1.msra.mxu0 0.0
    %129 = vmatprep.subr.mxu0 0.0
    %130 = vmatpush1.msra.mxu0 0.0
    %131 = vmatprep.subr.mxu0 0.0
    %132 = vmatpush1.msra.mxu0 0.0
    %133 = vmatprep.subr.mxu0 0.0
    %134 = vmatpush1.msra.mxu0 0.0
    %135 = vmatprep.mubr.f32.mxu0 0.0
    %136 = vmatmul.mubr.f32.gmra.mrb[0].mxu0 %v62
    %v137 = vpop.f32.mrb[0].mxu0
    %v138 = vadd.f32 %v58, %v137
    %v139 = vpop.f32.mrb[0].mxu0
    %140 = vmatprep.mubr.f32.mxu0 0.0
    %141 = vmatmul.mubr.f32.gmra.mrb[0].mxu0 %v65
    %v142 = vpop.f32.mrb[0].mxu0
    %v143 = vadd.f32 %v58, %v142
    %v144 = vpop.f32.mrb[0].mxu0
    %145 = vdwg.mxu0
    %vm146 = vcmp.ge.f32.partialorder %v138, 0.0
    %vm147 = vcmp.ge.f32.partialorder %v143, 0.0
    %v148 = vmul.f32 %v138, 0.01
    %v149 = vmul.f32 %v143, 0.01
    %v150 = vsel %vm146, %v138, %v148
    %v151 = vsel %vm147, %v143, %v149
    %v152 = vld [vmem:[#allocation3] sm:$0xff]
    %v153 = vld [vmem:[#allocation3 + $0x8] sm:$0xff]
    %v154 = vld [vmem:[#allocation3 + $0x10] sm:$0xff]
    %v155 = vld [vmem:[#allocation3 + $0x18] sm:$0xff]
    %v156 = vld [vmem:[#allocation3 + $0x20] sm:$0xff]
    %v157 = vld [vmem:[#allocation3 + $0x28] sm:$0xff]
    %v158 = vld [vmem:[#allocation3 + $0x30] sm:$0xff]
    %v159 = vld [vmem:[#allocation3 + $0x38] sm:$0xff]
    %v160 = vld [vmem:[#allocation3 + $0x40] sm:$0xff]
    %v161 = vld [vmem:[#allocation3 + $0x48] sm:$0xff]
    %v162 = vld [vmem:[#allocation3 + $0x50] sm:$0xf]
    %v163 = vld [vmem:[#allocation3 + $0x58] sm:$0xf]
    %v164 = vld [vmem:[%s4] sm:$0xff]
    %v165 = vld [vmem:[%s4 + $0x8] sm:$0xff]
    %v166 = vld [vmem:[%s4 + $0x10] sm:$0xff]
    %v167 = vld [vmem:[%s4 + $0x18] sm:$0xff]
    %v168 = vld [vmem:[%s4 + $0x20] sm:$0xff]
    %v169 = vld [vmem:[%s4 + $0x28] sm:$0xff]
    %v170 = vld [vmem:[%s4 + $0x30] sm:$0xff]
    %v171 = vld [vmem:[%s4 + $0x38] sm:$0xff]
    %vm172 = vcmask 261120
    %v174 = vsel %vm172, %v150, 0
    %v177 = vsel %vm172, %v151, 0
    %179 = vmatprep.subr.mxu0 %v165
    %180 = vmatpush1.msra.mxu0 %v164
    %181 = vmatprep.subr.mxu0 %v167
    %182 = vmatpush1.msra.mxu0 %v166
    %183 = vmatprep.subr.mxu0 %v169
    %184 = vmatpush1.msra.mxu0 %v168
    %185 = vmatprep.subr.mxu0 %v171
    %186 = vmatpush1.msra.mxu0 %v170
    %187 = vmatprep.subr.mxu0 0.0
    %188 = vmatpush1.msra.mxu0 0.0
    %189 = vmatprep.subr.mxu0 0.0
    %190 = vmatpush1.msra.mxu0 0.0
    %191 = vmatprep.subr.mxu0 0.0
    %192 = vmatpush1.msra.mxu0 0.0
    %193 = vmatprep.subr.mxu0 0.0
    %194 = vmatpush1.msra.mxu0 0.0
    %195 = vmatprep.subr.mxu0 0.0
    %196 = vmatpush1.msra.mxu0 0.0
    %197 = vmatprep.subr.mxu0 0.0
    %198 = vmatpush1.msra.mxu0 0.0
    %199 = vmatprep.subr.mxu0 0.0
    %200 = vmatpush1.msra.mxu0 0.0
    %201 = vmatprep.subr.mxu0 0.0
    %202 = vmatpush1.msra.mxu0 0.0
    %203 = vmatprep.subr.mxu0 0.0
    %204 = vmatpush1.msra.mxu0 0.0
    %205 = vmatprep.subr.mxu0 0.0
    %206 = vmatpush1.msra.mxu0 0.0
    %207 = vmatprep.subr.mxu0 0.0
    %208 = vmatpush1.msra.mxu0 0.0
    %209 = vmatprep.subr.mxu0 0.0
    %210 = vmatpush1.msra.mxu0 0.0
    %211 = vmatprep.subr.mxu0 0.0
    %212 = vmatpush1.msra.mxu0 0.0
    %213 = vmatprep.subr.mxu0 0.0
    %214 = vmatpush1.msra.mxu0 0.0
    %215 = vmatprep.subr.mxu0 0.0
    %216 = vmatpush1.msra.mxu0 0.0
    %217 = vmatprep.subr.mxu0 0.0
    %218 = vmatpush1.msra.mxu0 0.0
    %219 = vmatprep.subr.mxu0 0.0
    %220 = vmatpush1.msra.mxu0 0.0
    %221 = vmatprep.subr.mxu0 0.0
    %222 = vmatpush1.msra.mxu0 0.0
    %223 = vmatprep.subr.mxu0 0.0
    %224 = vmatpush1.msra.mxu0 0.0
    %225 = vmatprep.subr.mxu0 0.0
    %226 = vmatpush1.msra.mxu0 0.0
    %227 = vmatprep.subr.mxu0 0.0
    %228 = vmatpush1.msra.mxu0 0.0
    %229 = vmatprep.subr.mxu0 0.0
    %230 = vmatpush1.msra.mxu0 0.0
    %231 = vmatprep.subr.mxu0 0.0
    %232 = vmatpush1.msra.mxu0 0.0
    %233 = vmatprep.subr.mxu0 0.0
    %234 = vmatpush1.msra.mxu0 0.0
    %235 = vmatprep.subr.mxu0 0.0
    %236 = vmatpush1.msra.mxu0 0.0
    %237 = vmatprep.subr.mxu0 0.0
    %238 = vmatpush1.msra.mxu0 0.0
    %239 = vmatprep.subr.mxu0 0.0
    %240 = vmatpush1.msra.mxu0 0.0
    %241 = vmatprep.subr.mxu0 0.0
    %242 = vmatpush1.msra.mxu0 0.0
    %243 = vmatprep.mubr.f32.mxu0 0.0
    %244 = vmatmul.mubr.f32.gmra.mrb[0].mxu0 %v174
    %v245 = vpop.f32.mrb[0].mxu0
    %v246 = vadd.f32 0.0, %v245
    %v247 = vpop.f32.mrb[0].mxu0
    %v248 = vadd.f32 0.0, %v247
    %249 = vmatprep.mubr.f32.mxu0 0.0
    %250 = vmatmul.mubr.f32.gmra.mrb[0].mxu0 %v177
    %v251 = vpop.f32.mrb[0].mxu0
    %v252 = vadd.f32 0.0, %v251
    %v253 = vpop.f32.mrb[0].mxu0
    %v254 = vadd.f32 0.0, %v253
    %255 = vdwg.mxu0
    %v257 = vsel %vm67, %v162, 0
    %v260 = vsel %vm67, %v163, 0
    %262 = vmatprep.subr.mxu0 %v153
    %263 = vmatpush1.msra.mxu0 %v152
    %264 = vmatprep.subr.mxu0 %v155
    %265 = vmatpush1.msra.mxu0 %v154
    %266 = vmatprep.subr.mxu0 %v157
    %267 = vmatpush1.msra.mxu0 %v156
    %268 = vmatprep.subr.mxu0 %v159
    %269 = vmatpush1.msra.mxu0 %v158
    %270 = vmatprep.subr.mxu0 %v161
    %271 = vmatpush1.msra.mxu0 %v160
    %272 = vmatprep.subr.mxu0 %v260
    %273 = vmatpush1.msra.mxu0 %v257
    %274 = vmatprep.subr.mxu0 0.0
    %275 = vmatpush1.msra.mxu0 0.0
    %276 = vmatprep.subr.mxu0 0.0
    %277 = vmatpush1.msra.mxu0 0.0
    %278 = vmatprep.subr.mxu0 0.0
    %279 = vmatpush1.msra.mxu0 0.0
    %280 = vmatprep.subr.mxu0 0.0
    %281 = vmatpush1.msra.mxu0 0.0
    %282 = vmatprep.subr.mxu0 0.0
    %283 = vmatpush1.msra.mxu0 0.0
    %284 = vmatprep.subr.mxu0 0.0
    %285 = vmatpush1.msra.mxu0 0.0
    %286 = vmatprep.subr.mxu0 0.0
    %287 = vmatpush1.msra.mxu0 0.0
    %288 = vmatprep.subr.mxu0 0.0
    %289 = vmatpush1.msra.mxu0 0.0
    %290 = vmatprep.subr.mxu0 0.0
    %291 = vmatpush1.msra.mxu0 0.0
    %292 = vmatprep.subr.mxu0 0.0
    %293 = vmatpush1.msra.mxu0 0.0
    %294 = vmatprep.subr.mxu0 0.0
    %295 = vmatpush1.msra.mxu0 0.0
    %296 = vmatprep.subr.mxu0 0.0
    %297 = vmatpush1.msra.mxu0 0.0
    %298 = vmatprep.subr.mxu0 0.0
    %299 = vmatpush1.msra.mxu0 0.0
    %300 = vmatprep.subr.mxu0 0.0
    %301 = vmatpush1.msra.mxu0 0.0
    %302 = vmatprep.subr.mxu0 0.0
    %303 = vmatpush1.msra.mxu0 0.0
    %304 = vmatprep.subr.mxu0 0.0
    %305 = vmatpush1.msra.mxu0 0.0
    %306 = vmatprep.subr.mxu0 0.0
    %307 = vmatpush1.msra.mxu0 0.0
    %308 = vmatprep.subr.mxu0 0.0
    %309 = vmatpush1.msra.mxu0 0.0
    %310 = vmatprep.subr.mxu0 0.0
    %311 = vmatpush1.msra.mxu0 0.0
    %312 = vmatprep.subr.mxu0 0.0
    %313 = vmatpush1.msra.mxu0 0.0
    %314 = vmatprep.subr.mxu0 0.0
    %315 = vmatpush1.msra.mxu0 0.0
    %316 = vmatprep.subr.mxu0 0.0
    %317 = vmatpush1.msra.mxu0 0.0
    %318 = vmatprep.subr.mxu0 0.0
    %319 = vmatpush1.msra.mxu0 0.0
    %320 = vmatprep.subr.mxu0 0.0
    %321 = vmatpush1.msra.mxu0 0.0
    %322 = vmatprep.subr.mxu0 0.0
    %323 = vmatpush1.msra.mxu0 0.0
    %324 = vmatprep.subr.mxu0 0.0
    %325 = vmatpush1.msra.mxu0 0.0
    %326 = vmatprep.mubr.f32.mxu0 0.0
    %327 = vmatmul.mubr.f32.gmra.mrb[0].mxu0 %v62
    %v328 = vpop.f32.mrb[0].mxu0
    %v329 = vadd.f32 %v246, %v328
    %v330 = vpop.f32.mrb[0].mxu0
    %v331 = vadd.f32 %v248, %v330
    %332 = vmatprep.mubr.f32.mxu0 0.0
    %333 = vmatmul.mubr.f32.gmra.mrb[0].mxu0 %v65
    %v334 = vpop.f32.mrb[0].mxu0
    %v335 = vadd.f32 %v252, %v334
    %v336 = vpop.f32.mrb[0].mxu0
    %v337 = vadd.f32 %v254, %v336
    %338 = vdwg.mxu0
    %v339 = vld [vmem:[%s5] sm:$0x3]
    %v341 = vlaneseq
    %v342 = vshrl.u32 %v341, 7
    %v343 = vsub.s32 0, %v342
    %v344 = vrot.slane %v339, %v343
    %v345 = vlaneseq
    %v346 = vshrl.u32 %v345, 7
    %v347 = vsub.s32 1, %v346
    %v348 = vrot.slane %v339, %v347
    %v351 = vadd.f32 %v329, %v344
    %v352 = vadd.f32 %v331, %v348
    %v353 = vadd.f32 %v335, %v344
    %v354 = vadd.f32 %v337, %v348
    %v355 = vlaneseq
    %v356 = vand.u32 %v355, 127
    %v357 = vadd.s32 %v356, 128
    %vm358 = vcmp.lt.s32.totalorder %v356, 160
    %vm359 = vcmp.lt.s32.totalorder %v357, 160
    %v360 = vand.u32 2147483647, %v351
    %v361 = vand.u32 2147483647, %v352
    %v362 = vand.u32 2147483647, %v353
    %v363 = vand.u32 2147483647, %v354
    %v364 = vsel %vm358, %v360, %v351
    %v365 = vsel %vm359, %v361, %v352
    %v366 = vsel %vm358, %v362, %v353
    %v367 = vsel %vm359, %v363, %v354
    %368 = vset.pattern.permute.xlu0 40
    %369 = vperm.xlu0 %368, %v45
    %v370 = vpop.permute.xlu0 %369
    %372 = vset.pattern.permute.xlu0 40
    %373 = vperm.xlu0 %372, %v46
    %v374 = vpop.permute.xlu0 %373
    %v376 = vmul.f32 %v370, %v364
    %v377 = vmul.f32 %v374, %v366
    %380 = vrot.lane.b32.xlu0 %v376, 32
    %v381 = vpop.permute.xlu0 %380
    %382 = vrot.lane.b32.xlu0 %v377, 32
    %v383 = vpop.permute.xlu0 %382
    %v386 = vadd.f32 %v365, %v381
    %v387 = vadd.f32 %v367, %v383
    %388 = vset.pattern.permute.xlu0 41
    %389 = vperm.xlu0 %388, %v45
    %v390 = vpop.permute.xlu0 %389
    %392 = vset.pattern.permute.xlu0 41
    %393 = vperm.xlu0 %392, %v46
    %v394 = vpop.permute.xlu0 %393
    %v396 = vmul.f32 %v390, %v364
    %v397 = vmul.f32 %v394, %v366
    %v398 = vadd.f32 %v386, %v396
    %v399 = vadd.f32 %v387, %v397
    %400 = vset.pattern.permute.xlu0 42
    %401 = vperm.xlu0 %400, %v45
    %v402 = vpop.permute.xlu0 %401
    %404 = vset.pattern.permute.xlu0 42
    %405 = vperm.xlu0 %404, %v46
    %v406 = vpop.permute.xlu0 %405
    %v408 = vmul.f32 %v402, %v364
    %v409 = vmul.f32 %v406, %v366
    %412 = vrot.lane.b32.xlu0 %v408, 96
    %v413 = vpop.permute.xlu0 %412
    %414 = vrot.lane.b32.xlu0 %v409, 96
    %v415 = vpop.permute.xlu0 %414
    %v418 = vadd.f32 %v398, %v413
    %v419 = vadd.f32 %v399, %v415
    %420 = vset.pattern.permute.xlu0 43
    %421 = vperm.xlu0 %420, %v45
    %v422 = vpop.permute.xlu0 %421
    %424 = vset.pattern.permute.xlu0 43
    %425 = vperm.xlu0 %424, %v46
    %v426 = vpop.permute.xlu0 %425
    %v428 = vmul.f32 %v422, %v364
    %v429 = vmul.f32 %v426, %v366
    %432 = vrot.lane.b32.xlu0 %v428, 64
    %v433 = vpop.permute.xlu0 %432
    %434 = vrot.lane.b32.xlu0 %v429, 64
    %v435 = vpop.permute.xlu0 %434
    %v438 = vadd.f32 %v418, %v433
    %v439 = vadd.f32 %v419, %v435
    %vm440 = vcmp.gt.f32.partialorder %v438, 0.0
    %vm441 = vcmp.gt.f32.partialorder %v439, 0.0
    %v442 = vmul.f32 %v438, 1.442695
    %v443 = vpow.pop %v442
    %v444 = vmul.f32 %v439, 1.442695
    %v445 = vpow.pop %v444
    %v446 = vsub.f32 %v443, 1.0
    %v447 = vsub.f32 %v445, 1.0
    %v448 = vsel %vm440, %v438, %v446
    %v449 = vsel %vm441, %v439, %v447
    %v450 = vmax.f32 %v365, 0.0
    %v451 = vmax.f32 %v367, 0.0
    %454 = vrot.lane.b32.xlu0 %v365, 32
    %v455 = vpop.permute.xlu0 %454
    %456 = vrot.lane.b32.xlu0 %v367, 32
    %v457 = vpop.permute.xlu0 %456
    %v460 = vmul.f32 %v448, %v455
    %v461 = vmul.f32 %v449, %v457
    %v462 = vld [vmem:[%s6] sm:$0x1]
    %v464 = vlaneseq
    %v465 = vshrl.u32 %v464, 7
    %v466 = vsub.s32 0, %v465
    %v467 = vrot.slane %v462, %v466
    %468 = vrot.lane.b32.xlu0 %v467, 64
    %v469 = vpop.permute.xlu0 %468
    %v471 = vmul.f32 %v450, %v469
    %v472 = vmul.f32 %v451, %v469
    %475 = vrot.lane.b32.xlu0 %v471, 96
    %v476 = vpop.permute.xlu0 %475
    %477 = vrot.lane.b32.xlu0 %v472, 96
    %v478 = vpop.permute.xlu0 %477
    %v481 = vadd.f32 %v460, %v476
    %v482 = vadd.f32 %v461, %v478
    %485 = vrot.lane.b32.xlu0 %v481, 96
    %v486 = vpop.permute.xlu0 %485
    %487 = vrot.lane.b32.xlu0 %v482, 96
    %v488 = vpop.permute.xlu0 %487
    %v491 = vsel %vm172, %v486, 0.0
    %492 = vadd.xlane.f32.xlu0 %v491
    %v493 = vpop.xlane.xlu0 %492
    %v494 = vsel %vm172, %v488, 0.0
    %495 = vadd.xlane.f32.xlu0 %v494
    %v496 = vpop.xlane.xlu0 %495
    %v497 = vld [vmem:[#allocation2] sm:$0x1]
    %v499 = vlaneseq
    %v500 = vshrl.u32 %v499, 7
    %v501 = vsub.s32 0, %v500
    %v502 = vrot.slane %v497, %v501
    %v504 = vadd.f32 %v493, %v502
    %v505 = vadd.f32 %v496, %v502
    %vm506 = vcmask 7168
    %507 = vst.msk [vmem:[%s8] sm:$0xff] %vm506, %v504
    %508 = vst.msk [vmem:[%s8 + $0x8] sm:$0xff] %vm506, %v505
    // Predicated region
    $region38: #{tpu_custom_call.1} parent=1 // pred_check
      _
    $region39: #{tpu_custom_call.1} parent=1 // pred_check_branch
      %510 = sbr.rel (0) target = $region41
    $region40: #{tpu_custom_call.1} parent=1 // pred_region
      _
    $region41: #{tpu_custom_call.1} parent=1 // pred_fallthru
      _
    // Predicated region
    $region42: #{tpu_custom_call.1} parent=1 // pred_check
      _
    $region43: #{tpu_custom_call.1} parent=1 // pred_check_branch
      %512 = sbr.rel (0) target = $region45
    $region44: #{tpu_custom_call.1} parent=1 // pred_region
      _
    $region45: #{tpu_custom_call.1} parent=1 // pred_fallthru
      _
    %513 = vsyncpa [#allocation4], 1

</llo_original>
